<compile_context>
chip_gen: v6e
topology: v6e:2x2x1
jax: 0.10.0
libtpu: 0.0.40
codegen_flags: <defaults>
</compile_context>

<pallas_src>
import functools
import math

import jax
import jax.numpy as jnp
import numpy as np
from jax.experimental import pallas as pl
from jax.experimental.pallas import tpu as pltpu


def _readout_kernel(lines_ref,   # VMEM (tb*d, 4D)  bf16/f32  basis-selected spatial-mean lines
                    wf_ref,      # VMEM (4D, D)     bf16/f32  fused conv@W1 weight
                    bf_ref,      # VMEM (1, D)      f32       fused bias  (bconv@W1 + b1)
                    w2_ref,      # VMEM (1, D)      f32       Linear(D,1) weight as a row
                    b2_ref,      # VMEM (1, 1)      f32
                    out_ref,     # VMEM (tb, 1)     f32
                    *, tb, d, dim):
    # Single MXU matmul per grid step: (tb*d, 4D) @ (4D, D) -> f32, K = 4D lanes (=128 at D=32).
    h = jnp.dot(lines_ref[...], wf_ref[...], preferred_element_type=jnp.float32) + bf_ref[...]
    h = jnp.maximum(h, 0.0)                               # (tb*d, D), f32 VPU

    # Linear(D,1) + mean over the d lines == mean-then-dot (exact by linearity):
    # VPU multiply + lane reduce instead of an N=1 MXU matmul.
    hbar = jnp.mean(h.reshape(tb, d, dim), axis=1)        # (tb, D)
    logits = jnp.sum(hbar * w2_ref[...], axis=1, keepdims=True) + b2_ref[...]   # (tb, 1)
    out_ref[...] = logits


def _pick_block_b(B, d, D, itemsize):
    """Batch block: ~1 MiB of 'lines' per step, but keep >= 2 grid steps for v7x megacore."""
    bytes_per_b = d * 4 * D * itemsize
    target = max(256, (1 << 20) // max(bytes_per_b, 1))   # amortize ~0.35us/step fixed cost
    cap_two_steps = -(-B // 2)                            # ceil(B/2): leave work for 2nd TC
    tb = min(target, max(cap_two_steps, 8), B)
    return max(8, -(-tb // 8) * 8)                        # sublane-align


def readout_network(x, basis, params, grid_size, *, block_b=None, use_bf16_matmul=True):
    """x: (B, S, D) with S == (grid_size+1)**2 - 1; basis: (B,) int32. Returns (B,) f32."""
    B, S, D = x.shape
    d = grid_size
    dp1 = d + 1
    assert S == dp1 * dp1 - 1, "S must equal (grid_size+1)^2 - 1"

    wconv, bconv, w1, b1, w2, b2 = params
    mxu_dtype = jnp.bfloat16 if use_bf16_matmul else jnp.float32

    # ---- wrapper glue (pure layout / linear ops; XLA fuses with the input read) ----------
    # Prepend the zero token, view as an NHWC grid, im2col taps, then reduce spatially and
    # basis-select BEFORE the kernel: only the (B, d, 4D) "lines" slab is shipped to VMEM.
    xg = jnp.concatenate([jnp.zeros((B, 1, D), x.dtype), x], axis=1).reshape(B, dp1, dp1, D)
    taps = [xg[:, ky:ky + d, kx:kx + d, :] for ky in range(2) for kx in range(2)]
    patches = jnp.stack(taps, axis=3)                      # (B, d, d, 4, D), tap-major channels
    lines0 = jnp.mean(patches, axis=2).reshape(B, d, 4 * D)    # mean over W
    lines1 = jnp.mean(patches, axis=1).reshape(B, d, 4 * D)    # mean over H
    lines = jnp.where((basis != 0)[:, None, None], lines1, lines0)      # (B, d, 4D), f32

    # Fused weights (computed in f32; exact by linearity of conv/mean/bias before W1):
    #   h = (lines @ Wc + bc) @ W1 + b1 == lines @ (Wc @ W1) + (bc @ W1 + b1)
    wconv_mat = wconv.reshape(4 * D, D)                    # (ky,kx,cin) rows x cout cols
    wf = (wconv_mat.astype(jnp.float32) @ w1.astype(jnp.float32))        # (4D, D)
    bf = (bconv.astype(jnp.float32) @ w1.astype(jnp.float32)) + b1       # (1, D)
    w2_row = w2.T.astype(jnp.float32)                      # (1, D)

    # ---- batch blocking -------------------------------------------------------------------
    itemsize = jnp.dtype(mxu_dtype).itemsize
    if block_b is None:
        block_b = _pick_block_b(B, d, D, itemsize)
    tb = max(8, -(-min(block_b, B) // 8) * 8)
    b_pad = -(-B // tb) * tb
    if b_pad != B:
        lines = jnp.concatenate(
            [lines, jnp.zeros((b_pad - B, d, 4 * D), lines.dtype)], axis=0)
    nb = b_pad // tb

    # Lane-dense 2D slab; last dim 4D is a multiple of 128 whenever D % 32 == 0 (true here).
    lines2d = lines.reshape(b_pad * d, 4 * D).astype(mxu_dtype)
    wf_m = wf.astype(mxu_dtype)

    rows = tb * d
    kernel = functools.partial(_readout_kernel, tb=tb, d=d, dim=D)

    flops = 2 * b_pad * d * (4 * D) * D                    # fused matmul dominates
    bytes_accessed = (lines2d.size * lines2d.dtype.itemsize
                      + wf_m.size * wf_m.dtype.itemsize
                      + bf.size * 4 + w2_row.size * 4 + 4
                      + b_pad * 4)

    out = pl.pallas_call(
        kernel,
        out_shape=jax.ShapeDtypeStruct((b_pad, 1), jnp.float32),
        grid=(nb,),
        in_specs=[
            pl.BlockSpec((rows, 4 * D), lambda i: (i, 0)),   # lines (per batch block)
            pl.BlockSpec((4 * D, D), lambda i: (0, 0)),      # fused weight: resident
            pl.BlockSpec((1, D), lambda i: (0, 0)),
            pl.BlockSpec((1, D), lambda i: (0, 0)),
            pl.BlockSpec((1, 1), lambda i: (0, 0)),
        ],
        out_specs=pl.BlockSpec((tb, 1), lambda i: (i, 0)),   # one small store per (large) step
        compiler_params=pltpu.CompilerParams(
            dimension_semantics=("parallel",),               # batch axis shards across v7x TCs
            vmem_limit_bytes=32 * 1024 * 1024),              # explicit; safe on v7x's 64 MiB
        cost_estimate=pl.CostEstimate(flops=flops, transcendentals=0,
                                      bytes_accessed=bytes_accessed),
        # NOTE: default double-buffering suffices at ~1 MiB/step; only add
        # pipeline_mode=pl.Buffered(3) on the lines spec if a trace shows exposed input DMA.
    )(lines2d, wf_m, bf, w2_row, b2)

    return out[:B, 0]


def readout_reference(x, basis, params, grid_size):
    """Pure-JAX f32 reference matching the PyTorch forward."""
    wconv, bconv, w1, b1, w2, b2 = params
    B, S, D = x.shape
    d = grid_size
    dp1 = d + 1
    xg = jnp.concatenate([jnp.zeros((B, 1, D), x.dtype), x], axis=1).reshape(B, dp1, dp1, D)
    y = jnp.zeros((B, d, d, D), jnp.float32)
    for ky in range(2):
        for kx in range(2):
            y = y + jnp.einsum('bijc,co->bijo', xg[:, ky:ky + d, kx:kx + d, :], wconv[ky, kx])
    y = y + bconv
    lines0 = y.mean(axis=2)                      # mean over W
    lines1 = y.mean(axis=1)                      # mean over H
    lines = jnp.where((basis == 0)[:, None, None], lines0, lines1)
    h = jnp.maximum(lines @ w1 + b1, 0.0)
    logits = (h @ w2 + b2)[..., 0]               # (B, d)
    return logits.mean(axis=1)


def init_params(key, hidden_dim):
    """Deterministic xavier-uniform init matching the module's shapes."""
    D = hidden_dim

    def xavier(k, shape, fan_in, fan_out):
        bound = math.sqrt(6.0 / (fan_in + fan_out))
        return jax.random.uniform(k, shape, jnp.float32, -bound, bound)

    k1, k2, k3 = jax.random.split(key, 3)
    wconv = xavier(k1, (2, 2, D, D), D * 4, D * 4)   # Conv2d(D, D, 2), (kh, kw, Cin, Cout)
    bconv = jnp.zeros((1, D), jnp.float32)
    w1 = xavier(k2, (D, D), D, D)                    # Linear(D, D), stored (in, out)
    b1 = jnp.zeros((1, D), jnp.float32)
    w2 = xavier(k3, (D, 1), D, 1)                    # Linear(D, 1), stored (in, out)
    b2 = jnp.zeros((1, 1), jnp.float32)
    return (wconv, bconv, w1, b1, w2, b2)


if __name__ == "__main__":
    hidden_dim = 32
    grid_size = 4
    B = 32
    S = (grid_size + 1) ** 2 - 1          # 24

    key = jax.random.PRNGKey(0)
    kx, kb, kp = jax.random.split(key, 3)
    x = jax.random.normal(kx, (B, S, hidden_dim), jnp.float32)
    basis = jax.random.randint(kb, (B,), 0, 2).astype(jnp.int32)
    params = init_params(kp, hidden_dim)

    # f32 MXU path: same math as the module up to f32 summation order / weight pre-fusion.
    out_f32 = jax.block_until_ready(
        readout_network(x, basis, params, grid_size, use_bf16_matmul=False))
    # bf16 MXU path (v6e/v7x optimization): bf16 operands, f32 accumulation/epilogue.
    out_bf16 = jax.block_until_ready(
        readout_network(x, basis, params, grid_size, use_bf16_matmul=True))

    ref = readout_reference(x, basis, params, grid_size)
    np.testing.assert_allclose(np.asarray(out_f32), np.asarray(ref), rtol=1e-4, atol=1e-4)
    np.testing.assert_allclose(np.asarray(out_bf16), np.asarray(ref), rtol=5e-2, atol=5e-2)
    print("KERNEL_OK")
</pallas_src>

<mosaic_0001>
module attributes {stable_mosaic.version = 11 : i64} {
  func.func @_readout_kernel(%arg0: i32, %arg1: memref<64x128xf32, #tpu.memory_space<vmem>>, %arg2: memref<128x32xf32, #tpu.memory_space<vmem>>, %arg3: memref<1x32xf32, #tpu.memory_space<vmem>>, %arg4: memref<1x32xf32, #tpu.memory_space<vmem>>, %arg5: memref<1x1xf32, #tpu.memory_space<vmem>>, %arg6: memref<16x1xf32, #tpu.memory_space<vmem>>) attributes {dimension_semantics = [#tpu.dimension_semantics<parallel>], iteration_bounds = array<i64: 2>, scalar_prefetch = 0 : i64, scratch_operands = 0 : i64, tpu.core_type = #tpu.core_type<tc>, window_params = [{transform_indices = @transform_0, window_bounds = array<i64: 64, 128>}, {pipeline_mode = #tpu.pipeline_mode<synchronous>, transform_indices = @transform_1, window_bounds = array<i64: 128, 32>}, {pipeline_mode = #tpu.pipeline_mode<synchronous>, transform_indices = @transform_2, window_bounds = array<i64: 1, 32>}, {pipeline_mode = #tpu.pipeline_mode<synchronous>, transform_indices = @transform_3, window_bounds = array<i64: 1, 32>}, {pipeline_mode = #tpu.pipeline_mode<synchronous>, transform_indices = @transform_4, window_bounds = array<i64: 1, 1>}, {transform_indices = @transform_5, window_bounds = array<i64: 16, 1>}]} {
    %c0 = arith.constant 0 : index
    %c0_0 = arith.constant 0 : index
    %0 = vector.load %arg1[%c0, %c0_0] : memref<64x128xf32, #tpu.memory_space<vmem>>, vector<64x128xf32>
    %c0_1 = arith.constant 0 : index
    %c0_2 = arith.constant 0 : index
    %1 = vector.load %arg2[%c0_1, %c0_2] : memref<128x32xf32, #tpu.memory_space<vmem>>, vector<128x32xf32>
    %cst = arith.constant dense<0.000000e+00> : vector<64x32xf32>
    %2 = tpu.matmul %0, %1, %cst {dimension_numbers = #tpu.dot_dimension_numbers<[1], [0], [0], [1], [0, 0, 1, 1], [], []>} : vector<64x128xf32>, vector<128x32xf32>, vector<64x32xf32> -> vector<64x32xf32>
    %c0_3 = arith.constant 0 : index
    %c0_4 = arith.constant 0 : index
    %3 = vector.load %arg3[%c0_3, %c0_4] : memref<1x32xf32, #tpu.memory_space<vmem>>, vector<1x32xf32>
    %4 = vector.broadcast %3 : vector<1x32xf32> to vector<64x32xf32>
    %5 = arith.addf %2, %4 : vector<64x32xf32>
    %cst_5 = arith.constant 0.000000e+00 : f32
    %6 = vector.broadcast %cst_5 : f32 to vector<64x32xf32>
    %7 = arith.maximumf %5, %6 : vector<64x32xf32>
    %8 = vector.shape_cast %7 : vector<64x32xf32> to vector<16x4x32xf32>
    %cst_6 = arith.constant dense<0.000000e+00> : vector<16x32xf32>
    %9 = vector.multi_reduction <add>, %8, %cst_6 [1] : vector<16x4x32xf32> to vector<16x32xf32>
    %cst_7 = arith.constant 4.000000e+00 : f32
    %10 = vector.broadcast %cst_7 : f32 to vector<16x32xf32>
    %11 = arith.divf %9, %10 : vector<16x32xf32>
    %c0_8 = arith.constant 0 : index
    %c0_9 = arith.constant 0 : index
    %12 = vector.load %arg4[%c0_8, %c0_9] : memref<1x32xf32, #tpu.memory_space<vmem>>, vector<1x32xf32>
    %13 = vector.broadcast %12 : vector<1x32xf32> to vector<16x32xf32>
    %14 = arith.mulf %11, %13 : vector<16x32xf32>
    %cst_10 = arith.constant dense<0.000000e+00> : vector<16xf32>
    %15 = vector.multi_reduction <add>, %14, %cst_10 [1] : vector<16x32xf32> to vector<16xf32>
    %16 = vector.shape_cast %15 : vector<16xf32> to vector<16x1xf32>
    %c0_11 = arith.constant 0 : index
    %c0_12 = arith.constant 0 : index
    %17 = vector.load %arg5[%c0_11, %c0_12] : memref<1x1xf32, #tpu.memory_space<vmem>>, vector<1x1xf32>
    %18 = vector.broadcast %17 : vector<1x1xf32> to vector<16x1xf32>
    %19 = arith.addf %16, %18 : vector<16x1xf32>
    %c0_13 = arith.constant 0 : index
    %c0_14 = arith.constant 0 : index
    %20 = vector.load %arg6[%c0_13, %c0_14] : memref<16x1xf32, #tpu.memory_space<vmem>>, vector<16x1xf32>
    tpu.vector_store %arg6[%c0_13, %c0_14], %19 {strides = array<i32>} : memref<16x1xf32, #tpu.memory_space<vmem>>, vector<16x1xf32>,
    return
  }
  func.func @transform_0(%arg0: i32) -> (i32, i32) {
    %c0_i32 = arith.constant 0 : i32
    %c0_i32_0 = arith.constant 0 : i32
    return %arg0, %c0_i32 : i32, i32
  }
  func.func @transform_1(%arg0: i32) -> (i32, i32) {
    %c0_i32 = arith.constant 0 : i32
    %c0_i32_0 = arith.constant 0 : i32
    %c0_i32_1 = arith.constant 0 : i32
    return %c0_i32, %c0_i32_0 : i32, i32
  }
  func.func @transform_2(%arg0: i32) -> (i32, i32) {
    %c0_i32 = arith.constant 0 : i32
    %c0_i32_0 = arith.constant 0 : i32
    %c0_i32_1 = arith.constant 0 : i32
    return %c0_i32, %c0_i32_0 : i32, i32
  }
  func.func @transform_3(%arg0: i32) -> (i32, i32) {
    %c0_i32 = arith.constant 0 : i32
    %c0_i32_0 = arith.constant 0 : i32
    %c0_i32_1 = arith.constant 0 : i32
    return %c0_i32, %c0_i32_0 : i32, i32
  }
  func.func @transform_4(%arg0: i32) -> (i32, i32) {
    %c0_i32 = arith.constant 0 : i32
    %c0_i32_0 = arith.constant 0 : i32
    %c0_i32_1 = arith.constant 0 : i32
    return %c0_i32, %c0_i32_0 : i32, i32
  }
  func.func @transform_5(%arg0: i32) -> (i32, i32) {
    %c0_i32 = arith.constant 0 : i32
    %c0_i32_0 = arith.constant 0 : i32
    return %arg0, %c0_i32 : i32, i32
  }
}

</mosaic_0001>

<llo_original>
// kernel: tpu_custom_call.1
$region0: #{tpu_custom_call.1}
  #allocation0 [shape = 'u32[]', space=smem, size = 0x4, offset = 0x4, fixed_abs, tag = 'smem constant byte address 0x4 - core index']
  #allocation1 [shape = 'u32[144,128]{1,0:T(1,128)}', space=vmem, size = 0x12000, scoped, tag = 'internal scratch']
  #allocation2 [shape = 'f32[1,1]{1,0:T(1,128)S(1)}', space=vmem, size = 0x200, scoped, tag = 'scoped memory for tpu_custom_call.1']
  %s0 = inlined_call_operand.vmem [shape: f32[128,128], index: 0, kind: input, shape index: {}]
  %s1 = inlined_call_operand.vmem [shape: f32[128,32], index: 1, kind: input, shape index: {}]
  %s2 = inlined_call_operand.vmem [shape: f32[1,32], index: 2, kind: input, shape index: {}]
  %s3 = inlined_call_operand.vmem [shape: f32[1,32], index: 3, kind: input, shape index: {}]
  %s4 = inlined_call_operand.<no memory space> [shape: f32[1,1], index: 4, kind: input, shape index: {}]
  %s5 = inlined_call_operand.vmem [shape: f32[32,1], index: 5, kind: output, shape index: {}]
  %s6 = sld [smem:[#allocation0]]
  $region53: #{tpu_custom_call.1} parent=0
    _
  %s8 = ssub.s32 1, %s6
  %s9 = scalar_select 0, %s8, %s6
  %v10 = vstv %s4
  %11 = vst [vmem:[#allocation2] sm:$0x1] %v10
  loop: start=0, step=1, limit=4
  $region2: #{tpu_custom_call.1} parent=0 // loop_pre_header
    _
  $region3: #{tpu_custom_call.1} parent=0 // loop_header
    %s13 = sphi 0, %s17
    %p14 = scmp.ge.s32.totalorder %s13, 4
    %s23 = sphi 0, %s25
    %s26 = sphi 0, %s23
    %s27 = sphi 0, %s26
    %s43 = sphi 0, %s27
    %s47 = sphi 0, %s47
    %s49 = sphi 0, %s47
    %s50 = sphi 0, %s49
    %s64 = sphi 0, %s50
    %s68 = sphi 0, %s68
    %s70 = sphi 0, %s68
    %s71 = sphi 0, %s70
    %s85 = sphi 0, %s71
    %s89 = sphi 0, %s89
    %s91 = sphi 0, %s89
    %s92 = sphi 0, %s91
    %s106 = sphi 0, %s92
    %s110 = sphi 0, %s110
    %s112 = sphi 0, %s110
    %s113 = sphi 0, %s112
    %s127 = sphi 0, %s113
    %s133 = sphi 0, %s135
    %s136 = sphi 0, %s133
    %s137 = sphi 0, %s136
    %s153 = sphi 0, %s137
  $region4: #{tpu_custom_call.1} parent=0 // loop_header_branch
    %16 = sbr.rel (%p14) target = $region8
  $region5: #{tpu_custom_call.1} parent=0 // loop_body
    %s18 = ssub.s32 %s13, 1
    %s19 = ssub.s32 %s13, 2
    %s20 = sadd.s32 %s13, 1
    %s21 = ssub.s32 %s13, %s20
    %p22 = scmp.eq.s32.totalorder %s21, 0
    %s24 = sadd.s32 %s23, 1
    %s25 = scalar_select %p22, %s23, %s24
    %p28 = pneg %p22
    %p29 = scmp.eq.s32.totalorder %s13, 1
    %p30 = por %p28, %p29
    %p31 = scmp.ne.s32.totalorder %s23, %s26
    %p32 = scmp.eq.s32.totalorder %s13, 0
    %p33 = por %p31, %p32
    %p34 = scmp.ne.s32.totalorder %s23, %s26
    %p35 = scmp.eq.s32.totalorder %s18, 1
    %p36 = por %p34, %p35
    %p37 = scmp.ne.s32.totalorder %s26, %s27
    %p38 = scmp.eq.s32.totalorder %s18, 0
    %p39 = por %p37, %p38
    %p40 = scmp.ne.s32.totalorder %s26, %s27
    %p41 = scmp.eq.s32.totalorder %s19, 1
    %p42 = por %p40, %p41
    %p44 = scmp.ne.s32.totalorder %s27, %s43
    %p45 = scmp.eq.s32.totalorder %s19, 0
    %p46 = por %p44, %p45
    %s48 = sadd.s32 %s47, 1
    %p51 = scmp.eq.s32.totalorder %s13, 1
    %p52 = scmp.ne.s32.totalorder %s47, %s49
    %p53 = scmp.eq.s32.totalorder %s13, 0
    %p54 = por %p52, %p53
    %p55 = scmp.ne.s32.totalorder %s47, %s49
    %p56 = scmp.eq.s32.totalorder %s18, 1
    %p57 = por %p55, %p56
    %p58 = scmp.ne.s32.totalorder %s49, %s50
    %p59 = scmp.eq.s32.totalorder %s18, 0
    %p60 = por %p58, %p59
    %p61 = scmp.ne.s32.totalorder %s49, %s50
    %p62 = scmp.eq.s32.totalorder %s19, 1
    %p63 = por %p61, %p62
    %p65 = scmp.ne.s32.totalorder %s50, %s64
    %p66 = scmp.eq.s32.totalorder %s19, 0
    %p67 = por %p65, %p66
    %s69 = sadd.s32 %s68, 1
    %p72 = scmp.eq.s32.totalorder %s13, 1
    %p73 = scmp.ne.s32.totalorder %s68, %s70
    %p74 = scmp.eq.s32.totalorder %s13, 0
    %p75 = por %p73, %p74
    %p76 = scmp.ne.s32.totalorder %s68, %s70
    %p77 = scmp.eq.s32.totalorder %s18, 1
    %p78 = por %p76, %p77
    %p79 = scmp.ne.s32.totalorder %s70, %s71
    %p80 = scmp.eq.s32.totalorder %s18, 0
    %p81 = por %p79, %p80
    %p82 = scmp.ne.s32.totalorder %s70, %s71
    %p83 = scmp.eq.s32.totalorder %s19, 1
    %p84 = por %p82, %p83
    %p86 = scmp.ne.s32.totalorder %s71, %s85
    %p87 = scmp.eq.s32.totalorder %s19, 0
    %p88 = por %p86, %p87
    %s90 = sadd.s32 %s89, 1
    %p93 = scmp.eq.s32.totalorder %s13, 1
    %p94 = scmp.ne.s32.totalorder %s89, %s91
    %p95 = scmp.eq.s32.totalorder %s13, 0
    %p96 = por %p94, %p95
    %p97 = scmp.ne.s32.totalorder %s89, %s91
    %p98 = scmp.eq.s32.totalorder %s18, 1
    %p99 = por %p97, %p98
    %p100 = scmp.ne.s32.totalorder %s91, %s92
    %p101 = scmp.eq.s32.totalorder %s18, 0
    %p102 = por %p100, %p101
    %p103 = scmp.ne.s32.totalorder %s91, %s92
    %p104 = scmp.eq.s32.totalorder %s19, 1
    %p105 = por %p103, %p104
    %p107 = scmp.ne.s32.totalorder %s92, %s106
    %p108 = scmp.eq.s32.totalorder %s19, 0
    %p109 = por %p107, %p108
    %s111 = sadd.s32 %s110, 1
    %p114 = scmp.eq.s32.totalorder %s13, 1
    %p115 = scmp.ne.s32.totalorder %s110, %s112
    %p116 = scmp.eq.s32.totalorder %s13, 0
    %p117 = por %p115, %p116
    %p118 = scmp.ne.s32.totalorder %s110, %s112
    %p119 = scmp.eq.s32.totalorder %s18, 1
    %p120 = por %p118, %p119
    %p121 = scmp.ne.s32.totalorder %s112, %s113
    %p122 = scmp.eq.s32.totalorder %s18, 0
    %p123 = por %p121, %p122
    %p124 = scmp.ne.s32.totalorder %s112, %s113
    %p125 = scmp.eq.s32.totalorder %s19, 1
    %p126 = por %p124, %p125
    %p128 = scmp.ne.s32.totalorder %s113, %s127
    %p129 = scmp.eq.s32.totalorder %s19, 0
    %p130 = por %p128, %p129
    %s131 = ssub.s32 %s13, %s20
    %p132 = scmp.eq.s32.totalorder %s131, 0
    %s134 = sadd.s32 %s133, 1
    %s135 = scalar_select %p132, %s133, %s134
    %p138 = pneg %p132
    %p139 = scmp.eq.s32.totalorder %s13, 1
    %p140 = por %p138, %p139
    %p141 = scmp.ne.s32.totalorder %s133, %s136
    %p142 = scmp.eq.s32.totalorder %s13, 0
    %p143 = por %p141, %p142
    %p144 = scmp.ne.s32.totalorder %s133, %s136
    %p145 = scmp.eq.s32.totalorder %s18, 1
    %p146 = por %p144, %p145
    %p147 = scmp.ne.s32.totalorder %s136, %s137
    %p148 = scmp.eq.s32.totalorder %s18, 0
    %p149 = por %p147, %p148
    %p150 = scmp.ne.s32.totalorder %s136, %s137
    %p151 = scmp.eq.s32.totalorder %s19, 1
    %p152 = por %p150, %p151
    %p154 = scmp.ne.s32.totalorder %s137, %s153
    %p155 = scmp.eq.s32.totalorder %s19, 0
    %p156 = por %p154, %p155
    %p157 = scmp.le.s32.totalorder 1, %s13
    %p158 = scmp.lt.s32.totalorder %s13, 3
    %p159 = pnand %p157, %p158
    %p160 = pneg %p159
    // Predicated region
    $region9: #{tpu_custom_call.1} parent=5 // pred_check
      _
    $region10: #{tpu_custom_call.1} parent=5 // pred_check_branch
      %162 = sbr.rel (%p159) target = $region12
    $region11: #{tpu_custom_call.1} parent=5 // pred_region
      %s163 = ssub.s32 %s13, 1
      // Predicated region
      $region13: #{tpu_custom_call.1} parent=11 // pred_check
        %p164 = pneg %p60
      $region14: #{tpu_custom_call.1} parent=11 // pred_check_branch
        %166 = sbr.rel (%p164) target = $region16
      $region15: #{tpu_custom_call.1} parent=11 // pred_region
        _
      $region16: #{tpu_custom_call.1} parent=11 // pred_fallthru
        _
      // Predicated region
      $region17: #{tpu_custom_call.1} parent=11 // pred_check
        %p167 = pneg %p81
      $region18: #{tpu_custom_call.1} parent=11 // pred_check_branch
        %169 = sbr.rel (%p167) target = $region20
      $region19: #{tpu_custom_call.1} parent=11 // pred_region
        _
      $region20: #{tpu_custom_call.1} parent=11 // pred_fallthru
        _
      // Predicated region
      $region21: #{tpu_custom_call.1} parent=11 // pred_check
        %p170 = pneg %p102
      $region22: #{tpu_custom_call.1} parent=11 // pred_check_branch
        %172 = sbr.rel (%p170) target = $region24
      $region23: #{tpu_custom_call.1} parent=11 // pred_region
        _
      $region24: #{tpu_custom_call.1} parent=11 // pred_fallthru
        _
      // Predicated region
      $region25: #{tpu_custom_call.1} parent=11 // pred_check
        %p173 = pneg %p123
      $region26: #{tpu_custom_call.1} parent=11 // pred_check_branch
        %175 = sbr.rel (%p173) target = $region28
      $region27: #{tpu_custom_call.1} parent=11 // pred_region
        _
      $region28: #{tpu_custom_call.1} parent=11 // pred_fallthru
        _
    $region12: #{tpu_custom_call.1} parent=5 // pred_fallthru
      _
    %p176 = scmp.lt.s32.totalorder %s13, 2
    // Predicated region
    $region29: #{tpu_custom_call.1} parent=5 // pred_check
      %p177 = pneg %p176
    $region30: #{tpu_custom_call.1} parent=5 // pred_check_branch
      %179 = sbr.rel (%p177) target = $region32
    $region31: #{tpu_custom_call.1} parent=5 // pred_region
      // Predicated region
      $region33: #{tpu_custom_call.1} parent=31 // pred_check
        %p180 = pneg %p33
      $region34: #{tpu_custom_call.1} parent=31 // pred_check_branch
        %182 = sbr.rel (%p180) target = $region36
      $region35: #{tpu_custom_call.1} parent=31 // pred_region
        %s183 = smul.u32 8, %s13
        %p184 = scmp.lt.s32.totalorder %s183, 15
        %s185 = scalar_select %p184, %s183, 15
        %s186 = smul.addr %s185, 8
        %s187 = scalar_lea.vmem %s0, %s186
        %s188 = smul.u32 8, %s13
      $region36: #{tpu_custom_call.1} parent=31 // pred_fallthru
        _
    $region32: #{tpu_custom_call.1} parent=5 // pred_fallthru
      _
    %p189 = scmp.le.s32.totalorder 1, %s13
    %p190 = scmp.lt.s32.totalorder %s13, 3
    %p191 = pnand %p189, %p190
    %p192 = pneg %p191
    // Predicated region
    $region37: #{tpu_custom_call.1} parent=5 // pred_check
      _
    $region38: #{tpu_custom_call.1} parent=5 // pred_check_branch
      %194 = sbr.rel (%p191) target = $region40
    $region39: #{tpu_custom_call.1} parent=5 // pred_region
      %s195 = ssub.s32 %s13, 1
      %s196 = smul.u32 8, %s18
      %p197 = scmp.lt.s32.totalorder %s196, 15
      %s198 = scalar_select %p197, %s196, 15
      %s199 = smul.addr %s198, 8
      %s200 = scalar_lea.vmem %s0, %s199
      %p201 = pneg %p39
      %p202 = pneg %p36
      %p203 = pneg %p60
      %p204 = pneg %p57
      %p205 = pneg %p81
      %p206 = pneg %p78
      %p207 = pneg %p102
      %p208 = pneg %p99
      %p209 = pneg %p123
      %p210 = pneg %p120
      %p211 = pneg %p149
      %p212 = pneg %p146
      %s213 = smul.u32 2, %s18
      %p214 = scmp.lt.s32.totalorder %s213, 3
      %s215 = scalar_select %p214, %s213, 3
      %s216 = smul.addr %s215, 8
      %s217 = scalar_lea.vmem %s5, %s216
      %s218 = smul.u32 8, %s18
      %p219 = scmp.lt.s32.totalorder %s218, 15
      %s220 = scalar_select %p219, %s218, 15
      %s221 = smul.addr %s220, 8
      %s222 = scalar_lea.vmem %s0, %s221
      %s223 = smul.u32 8, %s18
      %s224 = smul.u32 2, %s18
      %p225 = scmp.lt.s32.totalorder %s224, 3
      %s226 = scalar_select %p225, %s224, 3
      %s227 = smul.addr %s226, 8
      %s228 = scalar_lea.vmem %s5, %s227
      %s229 = smul.u32 2, %s18
      %v230 = vld [vmem:[%s222] sm:$0xff]
      %v231 = vld [vmem:[%s222 + $0x8] sm:$0xff]
      %v232 = vld [vmem:[%s222 + $0x10] sm:$0xff]
      %v233 = vld [vmem:[%s222 + $0x18] sm:$0xff]
      %v234 = vld [vmem:[%s222 + $0x20] sm:$0xff]
      %v235 = vld [vmem:[%s222 + $0x28] sm:$0xff]
      %v236 = vld [vmem:[%s222 + $0x30] sm:$0xff]
      %v237 = vld [vmem:[%s222 + $0x38] sm:$0xff]
      %v238 = vld [vmem:[%s1] sm:$0xff]
      %v239 = vld [vmem:[%s1 + $0x8] sm:$0xff]
      %v240 = vld [vmem:[%s1 + $0x10] sm:$0xff]
      %v241 = vld [vmem:[%s1 + $0x18] sm:$0xff]
      %v242 = vld [vmem:[%s1 + $0x20] sm:$0xff]
      %v243 = vld [vmem:[%s1 + $0x28] sm:$0xff]
      %v244 = vld [vmem:[%s1 + $0x30] sm:$0xff]
      %v245 = vld [vmem:[%s1 + $0x38] sm:$0xff]
      %v246 = vld [vmem:[%s1 + $0x40] sm:$0xff]
      %v247 = vld [vmem:[%s1 + $0x48] sm:$0xff]
      %v248 = vld [vmem:[%s1 + $0x50] sm:$0xff]
      %v249 = vld [vmem:[%s1 + $0x58] sm:$0xff]
      %v250 = vld [vmem:[%s1 + $0x60] sm:$0xff]
      %v251 = vld [vmem:[%s1 + $0x68] sm:$0xff]
      %v252 = vld [vmem:[%s1 + $0x70] sm:$0xff]
      %v253 = vld [vmem:[%s1 + $0x78] sm:$0xff]
      %v254 = vld [vmem:[%s2] sm:$0x1]
      %v256 = vlaneseq
      %v257 = vshrl.u32 %v256, 7
      %v258 = vsub.s32 0, %v257
      %v259 = vrot.slane %v254, %v258
      %261 = vmatprep.subr.mxu0 0.0
      %262 = vmatpush1.msra.mxu0 %v253
      %263 = vmatprep.subr.mxu0 0.0
      %264 = vmatpush1.msra.mxu0 %v252
      %265 = vmatprep.subr.mxu0 0.0
      %266 = vmatpush1.msra.mxu0 %v251
      %267 = vmatprep.subr.mxu0 0.0
      %268 = vmatpush1.msra.mxu0 %v250
      %269 = vmatprep.subr.mxu0 0.0
      %270 = vmatpush1.msra.mxu0 %v249
      %271 = vmatprep.subr.mxu0 0.0
      %272 = vmatpush1.msra.mxu0 %v248
      %273 = vmatprep.subr.mxu0 0.0
      %274 = vmatpush1.msra.mxu0 %v247
      %275 = vmatprep.subr.mxu0 0.0
      %276 = vmatpush1.msra.mxu0 %v246
      %277 = vmatprep.subr.mxu0 0.0
      %278 = vmatpush1.msra.mxu0 %v245
      %279 = vmatprep.subr.mxu0 0.0
      %280 = vmatpush1.msra.mxu0 %v244
      %281 = vmatprep.subr.mxu0 0.0
      %282 = vmatpush1.msra.mxu0 %v243
      %283 = vmatprep.subr.mxu0 0.0
      %284 = vmatpush1.msra.mxu0 %v242
      %285 = vmatprep.subr.mxu0 0.0
      %286 = vmatpush1.msra.mxu0 %v241
      %287 = vmatprep.subr.mxu0 0.0
      %288 = vmatpush1.msra.mxu0 %v240
      %289 = vmatprep.subr.mxu0 0.0
      %290 = vmatpush1.msra.mxu0 %v239
      %291 = vmatprep.subr.mxu0 0.0
      %292 = vmatpush1.msra.mxu0 %v238
      %293 = vmatprep.subr.mxu0 0.0
      %294 = vmatpush2.msra.mxu0 0.0
      %295 = vmatprep.subr.mxu0 0.0
      %296 = vmatpush2.msra.mxu0 0.0
      %297 = vmatprep.subr.mxu0 0.0
      %298 = vmatpush2.msra.mxu0 0.0
      %299 = vmatprep.subr.mxu0 0.0
      %300 = vmatpush2.msra.mxu0 0.0
      %301 = vmatprep.subr.mxu0 0.0
      %302 = vmatpush2.msra.mxu0 0.0
      %303 = vmatprep.subr.mxu0 0.0
      %304 = vmatpush2.msra.mxu0 0.0
      %305 = vmatprep.subr.mxu0 0.0
      %306 = vmatpush2.msra.mxu0 0.0
      %307 = vmatprep.subr.mxu0 0.0
      %308 = vmatpush2.msra.mxu0 0.0
      %309 = vmatprep.subr.mxu0 0.0
      %310 = vmatpush2.msra.mxu0 0.0
      %311 = vmatprep.subr.mxu0 0.0
      %312 = vmatpush2.msra.mxu0 0.0
      %313 = vmatprep.subr.mxu0 0.0
      %314 = vmatpush2.msra.mxu0 0.0
      %315 = vmatprep.subr.mxu0 0.0
      %316 = vmatpush2.msra.mxu0 0.0
      %317 = vmatprep.subr.mxu0 0.0
      %318 = vmatpush2.msra.mxu0 0.0
      %319 = vmatprep.subr.mxu0 0.0
      %320 = vmatpush2.msra.mxu0 0.0
      %321 = vmatprep.subr.mxu0 0.0
      %322 = vmatpush2.msra.mxu0 0.0
      %323 = vmatprep.subr.mxu0 0.0
      %324 = vmatpush2.msra.mxu0 0.0
      %325 = vmatprep.mubr.f32.mxu0 0.0
      %326 = vmatmul.mubr.f32.gmra.mxu0 %v230
      %v327 = vpop.f32.mrf.mxu0
      %v328 = vadd.f32 %v259, %v327
      %v329 = vpop.f32.mrf.mxu0
      %330 = vmatprep.mubr.f32.mxu0 0.0
      %331 = vmatmul.mubr.f32.gmra.mxu0 %v231
      %v332 = vpop.f32.mrf.mxu0
      %v333 = vadd.f32 %v259, %v332
      %v334 = vpop.f32.mrf.mxu0
      %335 = vmatprep.mubr.f32.mxu0 0.0
      %336 = vmatmul.mubr.f32.gmra.mxu0 %v232
      %v337 = vpop.f32.mrf.mxu0
      %v338 = vadd.f32 %v259, %v337
      %v339 = vpop.f32.mrf.mxu0
      %340 = vmatprep.mubr.f32.mxu0 0.0
      %341 = vmatmul.mubr.f32.gmra.mxu0 %v233
      %v342 = vpop.f32.mrf.mxu0
      %v343 = vadd.f32 %v259, %v342
      %v344 = vpop.f32.mrf.mxu0
      %345 = vmatprep.mubr.f32.mxu0 0.0
      %346 = vmatmul.mubr.f32.gmra.mxu0 %v234
      %v347 = vpop.f32.mrf.mxu0
      %v348 = vadd.f32 %v259, %v347
      %v349 = vpop.f32.mrf.mxu0
      %350 = vmatprep.mubr.f32.mxu0 0.0
      %351 = vmatmul.mubr.f32.gmra.mxu0 %v235
      %v352 = vpop.f32.mrf.mxu0
      %v353 = vadd.f32 %v259, %v352
      %v354 = vpop.f32.mrf.mxu0
      %355 = vmatprep.mubr.f32.mxu0 0.0
      %356 = vmatmul.mubr.f32.gmra.mxu0 %v236
      %v357 = vpop.f32.mrf.mxu0
      %v358 = vadd.f32 %v259, %v357
      %v359 = vpop.f32.mrf.mxu0
      %360 = vmatprep.mubr.f32.mxu0 0.0
      %361 = vmatmul.mubr.f32.gmra.mxu0 %v237
      %v362 = vpop.f32.mrf.mxu0
      %v363 = vadd.f32 %v259, %v362
      %v364 = vpop.f32.mrf.mxu0
      %365 = vdwg.mxu0
      %v366 = vmax.f32 %v328, 0.0
      %v367 = vmax.f32 %v333, 0.0
      %v368 = vmax.f32 %v338, 0.0
      %v369 = vmax.f32 %v343, 0.0
      %v370 = vmax.f32 %v348, 0.0
      %v371 = vmax.f32 %v353, 0.0
      %v372 = vmax.f32 %v358, 0.0
      %v373 = vmax.f32 %v363, 0.0
      %v382 = vcombine.high %v366, %v366
      %v383 = vcombine.high %v367, %v367
      %v384 = vcombine.high %v368, %v368
      %v385 = vcombine.high %v369, %v369
      %v386 = vcombine.high %v370, %v370
      %v387 = vcombine.high %v371, %v371
      %v388 = vcombine.high %v372, %v372
      %v389 = vcombine.high %v373, %v373
      %vm398 = vcmask 257024
      %v399 = vsel %vm398, %v366, 0.0
      %v400 = vrot.slane %v399, 4
      %v401 = vadd.f32 %v399, %v400
      %v402 = vrot.slane %v401, 2
      %v403 = vadd.f32 %v401, %v402
      %v404 = vrot.slane %v403, 1
      %v405 = vadd.f32 %v403, %v404
      %v406 = vsel %vm398, %v382, 0.0
      %v407 = vrot.slane %v406, 4
      %v408 = vadd.f32 %v406, %v407
      %v409 = vrot.slane %v408, 2
      %v410 = vadd.f32 %v408, %v409
      %v411 = vrot.slane %v410, 1
      %v412 = vadd.f32 %v410, %v411
      %v413 = vsel %vm398, %v367, 0.0
      %v414 = vrot.slane %v413, 4
      %v415 = vadd.f32 %v413, %v414
      %v416 = vrot.slane %v415, 2
      %v417 = vadd.f32 %v415, %v416
      %v418 = vrot.slane %v417, 1
      %v419 = vadd.f32 %v417, %v418
      %v420 = vsel %vm398, %v383, 0.0
      %v421 = vrot.slane %v420, 4
      %v422 = vadd.f32 %v420, %v421
      %v423 = vrot.slane %v422, 2
      %v424 = vadd.f32 %v422, %v423
      %v425 = vrot.slane %v424, 1
      %v426 = vadd.f32 %v424, %v425
      %v427 = vsel %vm398, %v368, 0.0
      %v428 = vrot.slane %v427, 4
      %v429 = vadd.f32 %v427, %v428
      %v430 = vrot.slane %v429, 2
      %v431 = vadd.f32 %v429, %v430
      %v432 = vrot.slane %v431, 1
      %v433 = vadd.f32 %v431, %v432
      %v434 = vsel %vm398, %v384, 0.0
      %v435 = vrot.slane %v434, 4
      %v436 = vadd.f32 %v434, %v435
      %v437 = vrot.slane %v436, 2
      %v438 = vadd.f32 %v436, %v437
      %v439 = vrot.slane %v438, 1
      %v440 = vadd.f32 %v438, %v439
      %v441 = vsel %vm398, %v369, 0.0
      %v442 = vrot.slane %v441, 4
      %v443 = vadd.f32 %v441, %v442
      %v444 = vrot.slane %v443, 2
      %v445 = vadd.f32 %v443, %v444
      %v446 = vrot.slane %v445, 1
      %v447 = vadd.f32 %v445, %v446
      %v448 = vsel %vm398, %v385, 0.0
      %v449 = vrot.slane %v448, 4
      %v450 = vadd.f32 %v448, %v449
      %v451 = vrot.slane %v450, 2
      %v452 = vadd.f32 %v450, %v451
      %v453 = vrot.slane %v452, 1
      %v454 = vadd.f32 %v452, %v453
      %v455 = vsel %vm398, %v370, 0.0
      %v456 = vrot.slane %v455, 4
      %v457 = vadd.f32 %v455, %v456
      %v458 = vrot.slane %v457, 2
      %v459 = vadd.f32 %v457, %v458
      %v460 = vrot.slane %v459, 1
      %v461 = vadd.f32 %v459, %v460
      %v462 = vsel %vm398, %v386, 0.0
      %v463 = vrot.slane %v462, 4
      %v464 = vadd.f32 %v462, %v463
      %v465 = vrot.slane %v464, 2
      %v466 = vadd.f32 %v464, %v465
      %v467 = vrot.slane %v466, 1
      %v468 = vadd.f32 %v466, %v467
      %v469 = vsel %vm398, %v371, 0.0
      %v470 = vrot.slane %v469, 4
      %v471 = vadd.f32 %v469, %v470
      %v472 = vrot.slane %v471, 2
      %v473 = vadd.f32 %v471, %v472
      %v474 = vrot.slane %v473, 1
      %v475 = vadd.f32 %v473, %v474
      %v476 = vsel %vm398, %v387, 0.0
      %v477 = vrot.slane %v476, 4
      %v478 = vadd.f32 %v476, %v477
      %v479 = vrot.slane %v478, 2
      %v480 = vadd.f32 %v478, %v479
      %v481 = vrot.slane %v480, 1
      %v482 = vadd.f32 %v480, %v481
      %v483 = vsel %vm398, %v372, 0.0
      %v484 = vrot.slane %v483, 4
      %v485 = vadd.f32 %v483, %v484
      %v486 = vrot.slane %v485, 2
      %v487 = vadd.f32 %v485, %v486
      %v488 = vrot.slane %v487, 1
      %v489 = vadd.f32 %v487, %v488
      %v490 = vsel %vm398, %v388, 0.0
      %v491 = vrot.slane %v490, 4
      %v492 = vadd.f32 %v490, %v491
      %v493 = vrot.slane %v492, 2
      %v494 = vadd.f32 %v492, %v493
      %v495 = vrot.slane %v494, 1
      %v496 = vadd.f32 %v494, %v495
      %v497 = vsel %vm398, %v373, 0.0
      %v498 = vrot.slane %v497, 4
      %v499 = vadd.f32 %v497, %v498
      %v500 = vrot.slane %v499, 2
      %v501 = vadd.f32 %v499, %v500
      %v502 = vrot.slane %v501, 1
      %v503 = vadd.f32 %v501, %v502
      %v504 = vsel %vm398, %v389, 0.0
      %v505 = vrot.slane %v504, 4
      %v506 = vadd.f32 %v504, %v505
      %v507 = vrot.slane %v506, 2
      %v508 = vadd.f32 %v506, %v507
      %v509 = vrot.slane %v508, 1
      %v510 = vadd.f32 %v508, %v509
      %v511 = vrcp.pop 4.0
      %v512 = vmul.f32 %v405, %v511
      %v513 = vmul.f32 %v412, %v511
      %v514 = vmul.f32 %v419, %v511
      %v515 = vmul.f32 %v426, %v511
      %v516 = vmul.f32 %v433, %v511
      %v517 = vmul.f32 %v440, %v511
      %v518 = vmul.f32 %v447, %v511
      %v519 = vmul.f32 %v454, %v511
      %v520 = vmul.f32 %v461, %v511
      %v521 = vmul.f32 %v468, %v511
      %v522 = vmul.f32 %v475, %v511
      %v523 = vmul.f32 %v482, %v511
      %v524 = vmul.f32 %v489, %v511
      %v525 = vmul.f32 %v496, %v511
      %v526 = vmul.f32 %v503, %v511
      %v527 = vmul.f32 %v510, %v511
      %v528 = vld [vmem:[%s3] sm:$0x1]
      %v530 = vlaneseq
      %v531 = vshrl.u32 %v530, 7
      %v532 = vsub.s32 0, %v531
      %v533 = vrot.slane %v528, %v532
      %v535 = vmul.f32 %v512, %v533
      %v536 = vmul.f32 %v513, %v533
      %v537 = vmul.f32 %v514, %v533
      %v538 = vmul.f32 %v515, %v533
      %v539 = vmul.f32 %v516, %v533
      %v540 = vmul.f32 %v517, %v533
      %v541 = vmul.f32 %v518, %v533
      %v542 = vmul.f32 %v519, %v533
      %v543 = vmul.f32 %v520, %v533
      %v544 = vmul.f32 %v521, %v533
      %v545 = vmul.f32 %v522, %v533
      %v546 = vmul.f32 %v523, %v533
      %v547 = vmul.f32 %v524, %v533
      %v548 = vmul.f32 %v525, %v533
      %v549 = vmul.f32 %v526, %v533
      %v550 = vmul.f32 %v527, %v533
      %v567 = vrot.slane %v536, 7
      %vm568 = vcmask 1041409
      %v569 = vsel %vm568, %v567, %v535
      %v570 = vrot.slane %v537, 6
      %vm571 = vcmask 1042434
      %v572 = vsel %vm571, %v570, %v569
      %v573 = vrot.slane %v538, 5
      %vm574 = vcmask 1043459
      %v575 = vsel %vm574, %v573, %v572
      %v576 = vrot.slane %v539, 4
      %vm577 = vcmask 1044484
      %v578 = vsel %vm577, %v576, %v575
      %v579 = vrot.slane %v540, 3
      %vm580 = vcmask 1045509
      %v581 = vsel %vm580, %v579, %v578
      %v582 = vrot.slane %v541, 2
      %vm583 = vcmask 1046534
      %v584 = vsel %vm583, %v582, %v581
      %v585 = vrot.slane %v542, 1
      %vm586 = vcmask 1047559
      %v587 = vsel %vm586, %v585, %v584
      %v588 = vrot.slane %v544, 7
      %v589 = vsel %vm568, %v588, %v543
      %v590 = vrot.slane %v545, 6
      %v591 = vsel %vm571, %v590, %v589
      %v592 = vrot.slane %v546, 5
      %v593 = vsel %vm574, %v592, %v591
      %v594 = vrot.slane %v547, 4
      %v595 = vsel %vm577, %v594, %v593
      %v596 = vrot.slane %v548, 3
      %v597 = vsel %vm580, %v596, %v595
      %v598 = vrot.slane %v549, 2
      %v599 = vsel %vm583, %v598, %v597
      %v600 = vrot.slane %v550, 1
      %v601 = vsel %vm586, %v600, %v599
      %vm604 = vcmask 261120
      %v605 = vsel %vm604, %v587, 0.0
      %606 = vadd.xlane.f32.xlu0 %v605
      %v607 = vpop.xlane.xlu0 %606
      %v608 = vsel %vm604, %v601, 0.0
      %609 = vadd.xlane.f32.xlu0 %v608
      %v610 = vpop.xlane.xlu0 %609
      %v611 = vld [vmem:[#allocation2] sm:$0x1]
      %v613 = vlaneseq
      %v614 = vshrl.u32 %v613, 7
      %v615 = vsub.s32 0, %v614
      %v616 = vrot.slane %v611, %v615
      %v618 = vadd.f32 %v607, %v616
      %v619 = vadd.f32 %v610, %v616
      %vm620 = vcmask 7168
      %621 = vst.msk [vmem:[%s228] sm:$0xff] %vm620, %v618
      %622 = vst.msk [vmem:[%s228 + $0x8] sm:$0xff] %vm620, %v619
      %s623 = smul.u32 2, %s18
      %p624 = scmp.lt.s32.totalorder %s623, 3
      %s625 = scalar_select %p624, %s623, 3
      %s626 = smul.addr %s625, 8
      %s627 = scalar_lea.vmem %s5, %s626
      // Predicated region
      $region41: #{tpu_custom_call.1} parent=39 // pred_check
        %p628 = pneg %p146
      $region42: #{tpu_custom_call.1} parent=39 // pred_check_branch
        %630 = sbr.rel (%p628) target = $region44
      $region43: #{tpu_custom_call.1} parent=39 // pred_region
        %s631 = smul.u32 2, %s18
      $region44: #{tpu_custom_call.1} parent=39 // pred_fallthru
        _
    $region40: #{tpu_custom_call.1} parent=5 // pred_fallthru
      _
    %p632 = scmp.le.s32.totalorder 2, %s13
    // Predicated region
    $region45: #{tpu_custom_call.1} parent=5 // pred_check
      %p633 = pneg %p632
    $region46: #{tpu_custom_call.1} parent=5 // pred_check_branch
      %635 = sbr.rel (%p633) target = $region48
    $region47: #{tpu_custom_call.1} parent=5 // pred_region
      %s636 = ssub.s32 %s13, 2
      // Predicated region
      $region49: #{tpu_custom_call.1} parent=47 // pred_check
        %p637 = pneg %p152
      $region50: #{tpu_custom_call.1} parent=47 // pred_check_branch
        %639 = sbr.rel (%p637) target = $region52
      $region51: #{tpu_custom_call.1} parent=47 // pred_region
        %s640 = smul.u32 2, %s19
        %p641 = scmp.lt.s32.totalorder %s640, 3
        %s642 = scalar_select %p641, %s640, 3
        %s643 = smul.addr %s642, 8
        %s644 = scalar_lea.vmem %s5, %s643
      $region52: #{tpu_custom_call.1} parent=47 // pred_fallthru
        _
    $region48: #{tpu_custom_call.1} parent=5 // pred_fallthru
      _
  $region6: #{tpu_custom_call.1} parent=0 // loop_footer
    %s17 = sadd.s32 1, %s13
  $region7: #{tpu_custom_call.1} parent=0 // loop_footer_branch
    %12 = sbr.rel target = $region3
  $region8: #{tpu_custom_call.1} parent=0 // loop_exit
    _

</llo_original>
